<compile_context>
chip_gen: v7x
topology: tpu7x:2x2x1
jax: 0.10.0
libtpu: 0.0.40
codegen_flags: <defaults>
</compile_context>

<pallas_src>
import jax
import jax.numpy as jnp
from jax.experimental import pallas as pl
from jax.experimental.pallas import tpu as pltpu


def _cbam_kernel(x_ref, w1_ref, w2_ref, ma_ref, mm_ref, out_ref):
    f32 = jnp.float32
    x = x_ref[...].astype(f32)                  # (C, HW)  one batch sample
    w1 = w1_ref[...].astype(f32)                # (Cr, C)
    w2 = w2_ref[...].astype(f32)                # (C, Cr)

    C = x.shape[0]
    HW = x.shape[1]

    # ---------------- Channel attention ----------------
    avg_c = jnp.sum(x, axis=1, keepdims=True) * (1.0 / HW)          # (C, 1)
    max_c = jnp.max(x, axis=1, keepdims=True)                       # (C, 1)

    h_avg = jnp.maximum(jnp.dot(w1, avg_c, preferred_element_type=f32), 0.0)  # (Cr,1)
    h_max = jnp.maximum(jnp.dot(w1, max_c, preferred_element_type=f32), 0.0)  # (Cr,1)
    # fc(avg)+fc(max) = W2 @ (relu(W1@avg) + relu(W1@max))  (W2 is linear)
    ca = jax.nn.sigmoid(jnp.dot(w2, h_avg + h_max,
                                preferred_element_type=f32))        # (C, 1)

    xc = x * ca                                                     # (C, HW)

    # ---------------- Spatial attention -----------------
    avg_s = jnp.sum(xc, axis=0, keepdims=True) * (1.0 / C)          # (1, HW)
    max_s = jnp.max(xc, axis=0, keepdims=True)                      # (1, HW)

    # 7x7 conv (padding=3, no bias) expressed as two MXU matmuls against
    # precomputed dense (HW, HW) shift matrices (avg-channel / max-channel).
    conv = (jnp.dot(avg_s, ma_ref[...].astype(f32), preferred_element_type=f32)
            + jnp.dot(max_s, mm_ref[...].astype(f32), preferred_element_type=f32))
    sa = jax.nn.sigmoid(conv)                                       # (1, HW)

    out_ref[...] = (xc * sa).astype(out_ref.dtype)


def _conv_as_matmul(w_sp, H, W, ksize):
    """Build M^T of shape (HW, HW): out_flat = in_flat(1,HW) @ M^T for a
    ksize x ksize conv with padding ksize//2, one input channel, no bias."""
    HW = H * W
    pad = ksize // 2
    yy = jnp.arange(HW) // W
    xx = jnp.arange(HW) % W
    dy = yy[:, None] - yy[None, :] + pad        # rows = input idx, cols = output idx
    dx = xx[:, None] - xx[None, :] + pad
    valid = (dy >= 0) & (dy < ksize) & (dx >= 0) & (dx < ksize)
    khi = jnp.clip(dy, 0, ksize - 1)
    kwi = jnp.clip(dx, 0, ksize - 1)
    return jnp.where(valid, w_sp[khi, kwi], 0.0).astype(jnp.float32)


def cbam(x, params, ratio=8, kernel_size=7):
    B, C, H, W = x.shape
    HW = H * W
    Cr = C // ratio
    assert Cr >= 1, "in_planes must be >= ratio"
    assert C % 8 == 0 and HW % 128 == 0, "need tile-aligned (C, H*W) blocks"

    # glue: flatten spatial onto the lane axis, 1x1-conv weights -> dense mats
    x2d = x.reshape(B * C, HW)
    w1 = params['fc1_w'].reshape(Cr, C)                  # Conv2d(C, Cr, 1) weight
    w2 = params['fc2_w'].reshape(C, Cr)                  # Conv2d(Cr, C, 1) weight
    w_sp = params['sa_w'].reshape(2, kernel_size, kernel_size)
    ma = _conv_as_matmul(w_sp[0], H, W, kernel_size)     # applied to channel-avg map
    mm = _conv_as_matmul(w_sp[1], H, W, kernel_size)     # applied to channel-max map

    x_spec = pl.BlockSpec((C, HW), lambda b: (b, 0))
    full = lambda a: pl.BlockSpec(a.shape, lambda b: (0,) * a.ndim)

    out = pl.pallas_call(
        _cbam_kernel,
        out_shape=jax.ShapeDtypeStruct((B * C, HW), x.dtype),
        grid=(B,),
        in_specs=[x_spec, full(w1), full(w2), full(ma), full(mm)],
        out_specs=x_spec,
        compiler_params=pltpu.CompilerParams(dimension_semantics=("parallel",)),
    )(x2d, w1, w2, ma, mm)
    return out.reshape(B, C, H, W)


def reference(x, params, ratio=8, kernel_size=7):
    """Pure-JAX reference mirroring the PyTorch CBAM forward."""
    B, C, H, W = x.shape
    Cr = C // ratio
    w1 = params['fc1_w'].reshape(Cr, C)
    w2 = params['fc2_w'].reshape(C, Cr)

    avg = x.mean(axis=(2, 3))                    # (B, C)
    mx = x.max(axis=(2, 3))                      # (B, C)
    fc = lambda v: jnp.maximum(v @ w1.T, 0.0) @ w2.T
    ca = jax.nn.sigmoid(fc(avg) + fc(mx))[:, :, None, None]
    x = x * ca

    avg_s = x.mean(axis=1, keepdims=True)
    max_s = x.max(axis=1, keepdims=True)
    s = jnp.concatenate([avg_s, max_s], axis=1)  # (B, 2, H, W)
    pad = kernel_size // 2
    conv = jax.lax.conv_general_dilated(
        s, params['sa_w'], window_strides=(1, 1),
        padding=[(pad, pad), (pad, pad)],
        dimension_numbers=('NCHW', 'OIHW', 'NCHW'))
    sa = jax.nn.sigmoid(conv)
    return x * sa


if __name__ == "__main__":
    # ratio=16 needs C >= 16; use C=32 with ratio=8 to keep shapes small & valid.
    B, C, H, W = 2, 32, 16, 16
    ratio, ksize = 8, 7
    key = jax.random.PRNGKey(0)
    k = jax.random.split(key, 4)
    params = dict(
        fc1_w=jax.random.normal(k[0], (C // ratio, C, 1, 1), jnp.float32) * 0.2,
        fc2_w=jax.random.normal(k[1], (C, C // ratio, 1, 1), jnp.float32) * 0.2,
        sa_w=jax.random.normal(k[2], (1, 2, ksize, ksize), jnp.float32) * 0.2,
    )
    x = jax.random.normal(k[3], (B, C, H, W), jnp.float32)

    out = jax.block_until_ready(cbam(x, params, ratio=ratio, kernel_size=ksize))
    ref = reference(x, params, ratio=ratio, kernel_size=ksize)
    err = float(jnp.max(jnp.abs(out - ref)))
    assert jnp.allclose(out, ref, atol=1e-4, rtol=1e-4), f"max abs err {err}"
    print("KERNEL_OK")
</pallas_src>

<mosaic_0001>
module attributes {stable_mosaic.version = 11 : i64} {
  func.func @_cbam_kernel(%arg0: i32, %arg1: memref<32x256xf32, #tpu.memory_space<vmem>>, %arg2: memref<4x32xf32, #tpu.memory_space<vmem>>, %arg3: memref<32x4xf32, #tpu.memory_space<vmem>>, %arg4: memref<256x256xf32, #tpu.memory_space<vmem>>, %arg5: memref<256x256xf32, #tpu.memory_space<vmem>>, %arg6: memref<32x256xf32, #tpu.memory_space<vmem>>) attributes {dimension_semantics = [#tpu.dimension_semantics<parallel>], iteration_bounds = array<i64: 2>, scalar_prefetch = 0 : i64, scratch_operands = 0 : i64, tpu.core_type = #tpu.core_type<tc>, window_params = [{transform_indices = @transform_0, window_bounds = array<i64: 32, 256>}, {pipeline_mode = #tpu.pipeline_mode<synchronous>, transform_indices = @transform_1, window_bounds = array<i64: 4, 32>}, {pipeline_mode = #tpu.pipeline_mode<synchronous>, transform_indices = @transform_2, window_bounds = array<i64: 32, 4>}, {pipeline_mode = #tpu.pipeline_mode<synchronous>, transform_indices = @transform_3, window_bounds = array<i64: 256, 256>}, {pipeline_mode = #tpu.pipeline_mode<synchronous>, transform_indices = @transform_4, window_bounds = array<i64: 256, 256>}, {transform_indices = @transform_5, window_bounds = array<i64: 32, 256>}]} {
    %c0 = arith.constant 0 : index
    %c0_0 = arith.constant 0 : index
    %0 = vector.load %arg1[%c0, %c0_0] : memref<32x256xf32, #tpu.memory_space<vmem>>, vector<32x256xf32>
    %c0_1 = arith.constant 0 : index
    %c0_2 = arith.constant 0 : index
    %1 = vector.load %arg2[%c0_1, %c0_2] : memref<4x32xf32, #tpu.memory_space<vmem>>, vector<4x32xf32>
    %c0_3 = arith.constant 0 : index
    %c0_4 = arith.constant 0 : index
    %2 = vector.load %arg3[%c0_3, %c0_4] : memref<32x4xf32, #tpu.memory_space<vmem>>, vector<32x4xf32>
    %cst = arith.constant dense<0.000000e+00> : vector<32xf32>
    %3 = vector.multi_reduction <add>, %0, %cst [1] : vector<32x256xf32> to vector<32xf32>
    %4 = vector.shape_cast %3 : vector<32xf32> to vector<32x1xf32>
    %cst_5 = arith.constant 3.906250e-03 : f32
    %5 = vector.broadcast %cst_5 : f32 to vector<32x1xf32>
    %6 = arith.mulf %4, %5 : vector<32x1xf32>
    %cst_6 = arith.constant dense<0xFF800000> : vector<32xf32>
    %7 = vector.multi_reduction <maximumf>, %0, %cst_6 [1] : vector<32x256xf32> to vector<32xf32>
    %8 = vector.shape_cast %7 : vector<32xf32> to vector<32x1xf32>
    %cst_7 = arith.constant dense<0.000000e+00> : vector<4x1xf32>
    %9 = tpu.matmul %1, %6, %cst_7 {dimension_numbers = #tpu.dot_dimension_numbers<[1], [0], [0], [1], [0, 0, 1, 1], [], []>} : vector<4x32xf32>, vector<32x1xf32>, vector<4x1xf32> -> vector<4x1xf32>
    %cst_8 = arith.constant 0.000000e+00 : f32
    %10 = vector.broadcast %cst_8 : f32 to vector<4x1xf32>
    %11 = arith.maximumf %9, %10 : vector<4x1xf32>
    %cst_9 = arith.constant dense<0.000000e+00> : vector<4x1xf32>
    %12 = tpu.matmul %1, %8, %cst_9 {dimension_numbers = #tpu.dot_dimension_numbers<[1], [0], [0], [1], [0, 0, 1, 1], [], []>} : vector<4x32xf32>, vector<32x1xf32>, vector<4x1xf32> -> vector<4x1xf32>
    %cst_10 = arith.constant 0.000000e+00 : f32
    %13 = vector.broadcast %cst_10 : f32 to vector<4x1xf32>
    %14 = arith.maximumf %12, %13 : vector<4x1xf32>
    %15 = arith.addf %11, %14 : vector<4x1xf32>
    %cst_11 = arith.constant dense<0.000000e+00> : vector<32x1xf32>
    %16 = tpu.matmul %2, %15, %cst_11 {dimension_numbers = #tpu.dot_dimension_numbers<[1], [0], [0], [1], [0, 0, 1, 1], [], []>} : vector<32x4xf32>, vector<4x1xf32>, vector<32x1xf32> -> vector<32x1xf32>
    %17 = arith.negf %16 : vector<32x1xf32>
    %18 = math.exp %17 : vector<32x1xf32>
    %cst_12 = arith.constant 1.000000e+00 : f32
    %19 = vector.broadcast %cst_12 : f32 to vector<32x1xf32>
    %20 = arith.addf %19, %18 : vector<32x1xf32>
    %21 = arith.divf %19, %20 : vector<32x1xf32>
    %22 = vector.broadcast %21 : vector<32x1xf32> to vector<32x256xf32>
    %23 = arith.mulf %0, %22 : vector<32x256xf32>
    %cst_13 = arith.constant dense<0.000000e+00> : vector<256xf32>
    %24 = vector.multi_reduction <add>, %23, %cst_13 [0] : vector<32x256xf32> to vector<256xf32>
    %25 = vector.shape_cast %24 : vector<256xf32> to vector<1x256xf32>
    %cst_14 = arith.constant 3.125000e-02 : f32
    %26 = vector.broadcast %cst_14 : f32 to vector<1x256xf32>
    %27 = arith.mulf %25, %26 : vector<1x256xf32>
    %cst_15 = arith.constant dense<0xFF800000> : vector<256xf32>
    %28 = vector.multi_reduction <maximumf>, %23, %cst_15 [0] : vector<32x256xf32> to vector<256xf32>
    %29 = vector.shape_cast %28 : vector<256xf32> to vector<1x256xf32>
    %c0_16 = arith.constant 0 : index
    %c0_17 = arith.constant 0 : index
    %30 = vector.load %arg4[%c0_16, %c0_17] : memref<256x256xf32, #tpu.memory_space<vmem>>, vector<256x256xf32>
    %cst_18 = arith.constant dense<0.000000e+00> : vector<1x256xf32>
    %31 = tpu.matmul %27, %30, %cst_18 {dimension_numbers = #tpu.dot_dimension_numbers<[1], [0], [0], [1], [0, 0, 1, 1], [], []>} : vector<1x256xf32>, vector<256x256xf32>, vector<1x256xf32> -> vector<1x256xf32>
    %c0_19 = arith.constant 0 : index
    %c0_20 = arith.constant 0 : index
    %32 = vector.load %arg5[%c0_19, %c0_20] : memref<256x256xf32, #tpu.memory_space<vmem>>, vector<256x256xf32>
    %cst_21 = arith.constant dense<0.000000e+00> : vector<1x256xf32>
    %33 = tpu.matmul %29, %32, %cst_21 {dimension_numbers = #tpu.dot_dimension_numbers<[1], [0], [0], [1], [0, 0, 1, 1], [], []>} : vector<1x256xf32>, vector<256x256xf32>, vector<1x256xf32> -> vector<1x256xf32>
    %34 = arith.addf %31, %33 : vector<1x256xf32>
    %35 = arith.negf %34 : vector<1x256xf32>
    %36 = math.exp %35 : vector<1x256xf32>
    %cst_22 = arith.constant 1.000000e+00 : f32
    %37 = vector.broadcast %cst_22 : f32 to vector<1x256xf32>
    %38 = arith.addf %37, %36 : vector<1x256xf32>
    %39 = arith.divf %37, %38 : vector<1x256xf32>
    %40 = vector.broadcast %39 : vector<1x256xf32> to vector<32x256xf32>
    %41 = arith.mulf %23, %40 : vector<32x256xf32>
    %c0_23 = arith.constant 0 : index
    %c0_24 = arith.constant 0 : index
    %42 = vector.load %arg6[%c0_23, %c0_24] : memref<32x256xf32, #tpu.memory_space<vmem>>, vector<32x256xf32>
    tpu.vector_store %arg6[%c0_23, %c0_24], %41 {strides = array<i32>} : memref<32x256xf32, #tpu.memory_space<vmem>>, vector<32x256xf32>,
    return
  }
  func.func @transform_0(%arg0: i32) -> (i32, i32) {
    %c0_i32 = arith.constant 0 : i32
    %c0_i32_0 = arith.constant 0 : i32
    return %arg0, %c0_i32 : i32, i32
  }
  func.func @transform_1(%arg0: i32) -> (i32, i32) {
    %c0_i32 = arith.constant 0 : i32
    %c0_i32_0 = arith.constant 0 : i32
    %c0_i32_1 = arith.constant 0 : i32
    return %c0_i32, %c0_i32_0 : i32, i32
  }
  func.func @transform_2(%arg0: i32) -> (i32, i32) {
    %c0_i32 = arith.constant 0 : i32
    %c0_i32_0 = arith.constant 0 : i32
    %c0_i32_1 = arith.constant 0 : i32
    return %c0_i32, %c0_i32_0 : i32, i32
  }
  func.func @transform_3(%arg0: i32) -> (i32, i32) {
    %c0_i32 = arith.constant 0 : i32
    %c0_i32_0 = arith.constant 0 : i32
    %c0_i32_1 = arith.constant 0 : i32
    return %c0_i32, %c0_i32_0 : i32, i32
  }
  func.func @transform_4(%arg0: i32) -> (i32, i32) {
    %c0_i32 = arith.constant 0 : i32
    %c0_i32_0 = arith.constant 0 : i32
    %c0_i32_1 = arith.constant 0 : i32
    return %c0_i32, %c0_i32_0 : i32, i32
  }
  func.func @transform_5(%arg0: i32) -> (i32, i32) {
    %c0_i32 = arith.constant 0 : i32
    %c0_i32_0 = arith.constant 0 : i32
    return %arg0, %c0_i32 : i32, i32
  }
}

</mosaic_0001>

<llo_original>
// kernel: tpu_custom_call.1
$region0: #{tpu_custom_call.1}
  #allocation0 [shape = 'u32[]', space=smem, size = 0x4, offset = 0x4, fixed_abs, tag = 'smem constant byte address 0x4 - core index']
  #allocation1 [shape = 'u32[144,128]{1,0:T(1,128)}', space=vmem, size = 0x12000, scoped, tag = 'internal scratch']
  %s0 = inlined_call_operand.hbm [shape: f32[64,256], index: 0, kind: input, shape index: {}]
  %s1 = inlined_call_operand.vmem [shape: f32[4,32], index: 1, kind: input, shape index: {}]
  %s2 = inlined_call_operand.vmem [shape: f32[32,4], index: 2, kind: input, shape index: {}]
  %s3 = inlined_call_operand.hbm [shape: f32[256,256], index: 3, kind: input, shape index: {}]
  %s4 = inlined_call_operand.hbm [shape: f32[256,256], index: 4, kind: input, shape index: {}]
  %s5 = inlined_call_operand.hbm [shape: f32[64,256], index: 5, kind: output, shape index: {}]
  %s6 = sld [smem:[#allocation0]]
  $region65: #{tpu_custom_call.1} parent=0
    _
  %s8 = ssub.s32 1, %s6
  %s9 = scalar_select 0, %s8, %s6
  $region1: #{tpu_custom_call.1} parent=0
    #allocation2 [shape = 'u8[65536]{0}', space=vmem, size = 0x10000, scoped, tag = 'input window, operand 0']
    #allocation3 [shape = 's32[2]{0}', space=sflag, size = 0x8, scoped, tag = 'scoped memory for tpu_custom_call.1']
    #allocation4 [shape = 's32[2]{0}', space=sflag, size = 0x8, scoped, tag = 'scoped memory for tpu_custom_call.1']
    #allocation5 [shape = 'u8[262144]{0}', space=vmem, size = 0x40000, scoped, tag = 'input window, operand 3, single buffered']
    #allocation6 [shape = 's32[1]{0}', space=sflag, size = 0x4, scoped, tag = 'scoped memory for tpu_custom_call.1']
    #allocation7 [shape = 'u8[262144]{0}', space=vmem, size = 0x40000, scoped, tag = 'input window, operand 4, single buffered']
    #allocation8 [shape = 'u8[65536]{0}', space=vmem, size = 0x10000, scoped, tag = 'output window, operand 0']
    %10 = vsyncpa [#allocation3], 0
    %s11 = scalar_lea.sflag [#allocation3], 1
    %12 = vsyncpa %s11, 0
    %13 = vsyncpa [#allocation6], 0
    %14 = vsyncpa [#allocation4], 0
    %s15 = scalar_lea.sflag [#allocation4], 1
    %16 = vsyncpa %s15, 0
    loop: start=0, step=1, limit=4
    $region2: #{tpu_custom_call.1} parent=1 // loop_pre_header
      _
    $region3: #{tpu_custom_call.1} parent=1 // loop_header
      %s18 = sphi 0, %s22
      %p19 = scmp.ge.s32.totalorder %s18, 4
      %s28 = sphi 0, %s30
      %s31 = sphi 0, %s28
      %s32 = sphi 0, %s31
      %s48 = sphi 0, %s32
      %s52 = sphi 0, %s52
      %s54 = sphi 0, %s52
      %s55 = sphi 0, %s54
      %s69 = sphi 0, %s55
      %s73 = sphi 0, %s73
      %s75 = sphi 0, %s73
      %s76 = sphi 0, %s75
      %s90 = sphi 0, %s76
      %s94 = sphi 0, %s94
      %s96 = sphi 0, %s94
      %s97 = sphi 0, %s96
      %s111 = sphi 0, %s97
      %s115 = sphi 0, %s115
      %s117 = sphi 0, %s115
      %s118 = sphi 0, %s117
      %s132 = sphi 0, %s118
      %s138 = sphi 0, %s140
      %s141 = sphi 0, %s138
      %s142 = sphi 0, %s141
      %s158 = sphi 0, %s142
    $region4: #{tpu_custom_call.1} parent=1 // loop_header_branch
      %21 = sbr.rel (%p19) target = $region8
    $region5: #{tpu_custom_call.1} parent=1 // loop_body
      %s23 = ssub.s32 %s18, 1
      %s24 = ssub.s32 %s18, 2
      %s25 = sadd.s32 %s18, 1
      %s26 = ssub.s32 %s18, %s25
      %p27 = scmp.eq.s32.totalorder %s26, 0
      %s29 = sadd.s32 %s28, 1
      %s30 = scalar_select %p27, %s28, %s29
      %p33 = pneg %p27
      %p34 = scmp.eq.s32.totalorder %s18, 1
      %p35 = por %p33, %p34
      %p36 = scmp.ne.s32.totalorder %s28, %s31
      %p37 = scmp.eq.s32.totalorder %s18, 0
      %p38 = por %p36, %p37
      %p39 = scmp.ne.s32.totalorder %s28, %s31
      %p40 = scmp.eq.s32.totalorder %s23, 1
      %p41 = por %p39, %p40
      %p42 = scmp.ne.s32.totalorder %s31, %s32
      %p43 = scmp.eq.s32.totalorder %s23, 0
      %p44 = por %p42, %p43
      %p45 = scmp.ne.s32.totalorder %s31, %s32
      %p46 = scmp.eq.s32.totalorder %s24, 1
      %p47 = por %p45, %p46
      %p49 = scmp.ne.s32.totalorder %s32, %s48
      %p50 = scmp.eq.s32.totalorder %s24, 0
      %p51 = por %p49, %p50
      %s53 = sadd.s32 %s52, 1
      %p56 = scmp.eq.s32.totalorder %s18, 1
      %p57 = scmp.ne.s32.totalorder %s52, %s54
      %p58 = scmp.eq.s32.totalorder %s18, 0
      %p59 = por %p57, %p58
      %p60 = scmp.ne.s32.totalorder %s52, %s54
      %p61 = scmp.eq.s32.totalorder %s23, 1
      %p62 = por %p60, %p61
      %p63 = scmp.ne.s32.totalorder %s54, %s55
      %p64 = scmp.eq.s32.totalorder %s23, 0
      %p65 = por %p63, %p64
      %p66 = scmp.ne.s32.totalorder %s54, %s55
      %p67 = scmp.eq.s32.totalorder %s24, 1
      %p68 = por %p66, %p67
      %p70 = scmp.ne.s32.totalorder %s55, %s69
      %p71 = scmp.eq.s32.totalorder %s24, 0
      %p72 = por %p70, %p71
      %s74 = sadd.s32 %s73, 1
      %p77 = scmp.eq.s32.totalorder %s18, 1
      %p78 = scmp.ne.s32.totalorder %s73, %s75
      %p79 = scmp.eq.s32.totalorder %s18, 0
      %p80 = por %p78, %p79
      %p81 = scmp.ne.s32.totalorder %s73, %s75
      %p82 = scmp.eq.s32.totalorder %s23, 1
      %p83 = por %p81, %p82
      %p84 = scmp.ne.s32.totalorder %s75, %s76
      %p85 = scmp.eq.s32.totalorder %s23, 0
      %p86 = por %p84, %p85
      %p87 = scmp.ne.s32.totalorder %s75, %s76
      %p88 = scmp.eq.s32.totalorder %s24, 1
      %p89 = por %p87, %p88
      %p91 = scmp.ne.s32.totalorder %s76, %s90
      %p92 = scmp.eq.s32.totalorder %s24, 0
      %p93 = por %p91, %p92
      %s95 = sadd.s32 %s94, 1
      %p98 = scmp.eq.s32.totalorder %s18, 1
      %p99 = scmp.ne.s32.totalorder %s94, %s96
      %p100 = scmp.eq.s32.totalorder %s18, 0
      %p101 = por %p99, %p100
      %p102 = scmp.ne.s32.totalorder %s94, %s96
      %p103 = scmp.eq.s32.totalorder %s23, 1
      %p104 = por %p102, %p103
      %p105 = scmp.ne.s32.totalorder %s96, %s97
      %p106 = scmp.eq.s32.totalorder %s23, 0
      %p107 = por %p105, %p106
      %p108 = scmp.ne.s32.totalorder %s96, %s97
      %p109 = scmp.eq.s32.totalorder %s24, 1
      %p110 = por %p108, %p109
      %p112 = scmp.ne.s32.totalorder %s97, %s111
      %p113 = scmp.eq.s32.totalorder %s24, 0
      %p114 = por %p112, %p113
      %s116 = sadd.s32 %s115, 1
      %p119 = scmp.eq.s32.totalorder %s18, 1
      %p120 = scmp.ne.s32.totalorder %s115, %s117
      %p121 = scmp.eq.s32.totalorder %s18, 0
      %p122 = por %p120, %p121
      %p123 = scmp.ne.s32.totalorder %s115, %s117
      %p124 = scmp.eq.s32.totalorder %s23, 1
      %p125 = por %p123, %p124
      %p126 = scmp.ne.s32.totalorder %s117, %s118
      %p127 = scmp.eq.s32.totalorder %s23, 0
      %p128 = por %p126, %p127
      %p129 = scmp.ne.s32.totalorder %s117, %s118
      %p130 = scmp.eq.s32.totalorder %s24, 1
      %p131 = por %p129, %p130
      %p133 = scmp.ne.s32.totalorder %s118, %s132
      %p134 = scmp.eq.s32.totalorder %s24, 0
      %p135 = por %p133, %p134
      %s136 = ssub.s32 %s18, %s25
      %p137 = scmp.eq.s32.totalorder %s136, 0
      %s139 = sadd.s32 %s138, 1
      %s140 = scalar_select %p137, %s138, %s139
      %p143 = pneg %p137
      %p144 = scmp.eq.s32.totalorder %s18, 1
      %p145 = por %p143, %p144
      %p146 = scmp.ne.s32.totalorder %s138, %s141
      %p147 = scmp.eq.s32.totalorder %s18, 0
      %p148 = por %p146, %p147
      %p149 = scmp.ne.s32.totalorder %s138, %s141
      %p150 = scmp.eq.s32.totalorder %s23, 1
      %p151 = por %p149, %p150
      %p152 = scmp.ne.s32.totalorder %s141, %s142
      %p153 = scmp.eq.s32.totalorder %s23, 0
      %p154 = por %p152, %p153
      %p155 = scmp.ne.s32.totalorder %s141, %s142
      %p156 = scmp.eq.s32.totalorder %s24, 1
      %p157 = por %p155, %p156
      %p159 = scmp.ne.s32.totalorder %s142, %s158
      %p160 = scmp.eq.s32.totalorder %s24, 0
      %p161 = por %p159, %p160
      %p162 = scmp.le.s32.totalorder 1, %s18
      %p163 = scmp.lt.s32.totalorder %s18, 3
      %p164 = pnand %p162, %p163
      %p165 = pneg %p164
      // Predicated region
      $region9: #{tpu_custom_call.1} parent=5 // pred_check
        _
      $region10: #{tpu_custom_call.1} parent=5 // pred_check_branch
        %167 = sbr.rel (%p164) target = $region12
      $region11: #{tpu_custom_call.1} parent=5 // pred_region
        %s168 = ssub.s32 %s18, 1
        // Predicated region
        $region13: #{tpu_custom_call.1} parent=11 // pred_check
          %p169 = pneg %p65
        $region14: #{tpu_custom_call.1} parent=11 // pred_check_branch
          %171 = sbr.rel (%p169) target = $region16
        $region15: #{tpu_custom_call.1} parent=11 // pred_region
          _
        $region16: #{tpu_custom_call.1} parent=11 // pred_fallthru
          _
        // Predicated region
        $region17: #{tpu_custom_call.1} parent=11 // pred_check
          %p172 = pneg %p86
        $region18: #{tpu_custom_call.1} parent=11 // pred_check_branch
          %174 = sbr.rel (%p172) target = $region20
        $region19: #{tpu_custom_call.1} parent=11 // pred_region
          _
        $region20: #{tpu_custom_call.1} parent=11 // pred_fallthru
          _
        // Predicated region
        $region21: #{tpu_custom_call.1} parent=11 // pred_check
          %p175 = pneg %p107
        $region22: #{tpu_custom_call.1} parent=11 // pred_check_branch
          %177 = sbr.rel (%p175) target = $region24
        $region23: #{tpu_custom_call.1} parent=11 // pred_region
          %s179 = ssub.s32 8192, 8192
          %180 = vsyncadd [#allocation6], %s179
          %s181 = sshll.u32 [#allocation5], 4
          %s182 = int_to_ptr.vmem [resolvable:$true] %s181
          %187 = dma.hbm_to_vmem [thread:$0]  %s3, 8192, %s182, [#allocation6], 256, 256, 16
        $region24: #{tpu_custom_call.1} parent=11 // pred_fallthru
          _
        // Predicated region
        $region25: #{tpu_custom_call.1} parent=11 // pred_check
          %p188 = pneg %p128
        $region26: #{tpu_custom_call.1} parent=11 // pred_check_branch
          %190 = sbr.rel (%p188) target = $region28
        $region27: #{tpu_custom_call.1} parent=11 // pred_region
          %s192 = ssub.s32 8192, 8192
          %193 = vsyncadd [#allocation6], %s192
          %s194 = sshll.u32 [#allocation7], 4
          %s195 = int_to_ptr.vmem [resolvable:$true] %s194
          %200 = dma.hbm_to_vmem [thread:$0]  %s4, 8192, %s195, [#allocation6], 256, 256, 16
        $region28: #{tpu_custom_call.1} parent=11 // pred_fallthru
          _
      $region12: #{tpu_custom_call.1} parent=5 // pred_fallthru
        _
      %p201 = scmp.lt.s32.totalorder %s18, 2
      // Predicated region
      $region29: #{tpu_custom_call.1} parent=5 // pred_check
        %p202 = pneg %p201
      $region30: #{tpu_custom_call.1} parent=5 // pred_check_branch
        %204 = sbr.rel (%p202) target = $region32
      $region31: #{tpu_custom_call.1} parent=5 // pred_region
        // Predicated region
        $region33: #{tpu_custom_call.1} parent=31 // pred_check
          %p205 = pneg %p38
        $region34: #{tpu_custom_call.1} parent=31 // pred_check_branch
          %207 = sbr.rel (%p205) target = $region36
        $region35: #{tpu_custom_call.1} parent=31 // pred_region
          %s208 = sand.u32 %s28, 1
          %s209 = scalar_lea.sflag [#allocation3], %s208
          %s210 = sand.u32 %s28, 1
          %s211 = smul.addr %s210, 64
          %s212 = scalar_lea.vmem [#allocation2], %s211
          %s213 = smul.u32 4, %s18
          %s215 = ssub.s32 1024, 1024
          %216 = vsyncadd %s209, %s215
          %s217 = smul.addr %s213, 2
          %s218 = smul.addr %s217, 128
          %s219 = scalar_lea.hbm %s0, %s218
          %s220 = sshll.u32 %s212, 4
          %s221 = int_to_ptr.vmem [resolvable:$true] %s220
          %226 = dma.hbm_to_vmem [thread:$0]  %s219, 1024, %s221, %s209, 256, 256, 16
        $region36: #{tpu_custom_call.1} parent=31 // pred_fallthru
          _
      $region32: #{tpu_custom_call.1} parent=5 // pred_fallthru
        _
      %p227 = scmp.le.s32.totalorder 1, %s18
      %p228 = scmp.lt.s32.totalorder %s18, 3
      %p229 = pnand %p227, %p228
      %p230 = pneg %p229
      // Predicated region
      $region37: #{tpu_custom_call.1} parent=5 // pred_check
        _
      $region38: #{tpu_custom_call.1} parent=5 // pred_check_branch
        %232 = sbr.rel (%p229) target = $region40
      $region39: #{tpu_custom_call.1} parent=5 // pred_region
        %s233 = ssub.s32 %s18, 1
        %s234 = sand.u32 %s31, 1
        %s235 = scalar_lea.sflag [#allocation3], %s234
        %s236 = sand.u32 %s31, 1
        %s237 = smul.addr %s236, 64
        %s238 = scalar_lea.vmem [#allocation2], %s237
        // Predicated region
        $region41: #{tpu_custom_call.1} parent=39 // pred_check
          %p239 = pneg %p44
        $region42: #{tpu_custom_call.1} parent=39 // pred_check_branch
          %241 = sbr.rel (%p239) target = $region44
        $region43: #{tpu_custom_call.1} parent=39 // pred_region
          %242 = dma.done %s235, 1024
        $region44: #{tpu_custom_call.1} parent=39 // pred_fallthru
          _
        // Predicated region
        $region45: #{tpu_custom_call.1} parent=39 // pred_check
          %p243 = pneg %p107
        $region46: #{tpu_custom_call.1} parent=39 // pred_check_branch
          %245 = sbr.rel (%p243) target = $region48
        $region47: #{tpu_custom_call.1} parent=39 // pred_region
          %246 = dma.done [#allocation6], 8192
        $region48: #{tpu_custom_call.1} parent=39 // pred_fallthru
          _
        // Predicated region
        $region49: #{tpu_custom_call.1} parent=39 // pred_check
          %p247 = pneg %p128
        $region50: #{tpu_custom_call.1} parent=39 // pred_check_branch
          %249 = sbr.rel (%p247) target = $region52
        $region51: #{tpu_custom_call.1} parent=39 // pred_region
          %250 = dma.done [#allocation6], 8192
        $region52: #{tpu_custom_call.1} parent=39 // pred_fallthru
          _
        %s251 = sand.u32 %s31, 1
        %s252 = scalar_lea.sflag [#allocation3], %s251
        %s253 = sand.u32 %s31, 1
        %s254 = smul.addr %s253, 64
        %s255 = scalar_lea.vmem [#allocation2], %s254
        %p256 = pneg %p44
        %p257 = pneg %p41
        %p258 = pneg %p65
        %p259 = pneg %p62
        %p260 = pneg %p86
        %p261 = pneg %p83
        %p262 = pneg %p107
        %p263 = pneg %p104
        %p264 = pneg %p128
        %p265 = pneg %p125
        %p266 = pneg %p154
        %p267 = pneg %p151
        %s268 = sand.u32 %s141, 1
        %s269 = scalar_lea.sflag [#allocation4], %s268
        %s270 = sand.u32 %s141, 1
        %s271 = smul.addr %s270, 64
        %s272 = scalar_lea.vmem [#allocation8], %s271
        %s273 = smul.u32 4, %s23
        %s274 = smul.u32 4, %s23
        %v275 = vld [vmem:[%s238] sm:$0xff]
        %v276 = vld [vmem:[%s238 + $0x8] sm:$0xff]
        %v277 = vld [vmem:[%s238 + $0x10] sm:$0xff]
        %v278 = vld [vmem:[%s238 + $0x18] sm:$0xff]
        %v279 = vld [vmem:[%s238 + $0x20] sm:$0xff]
        %v280 = vld [vmem:[%s238 + $0x28] sm:$0xff]
        %v281 = vld [vmem:[%s238 + $0x30] sm:$0xff]
        %v282 = vld [vmem:[%s238 + $0x38] sm:$0xff]
        %v283 = vld [vmem:[%s1] sm:$0xf]
        %v284 = vld [vmem:[%s2] sm:$0xff]
        %v285 = vld [vmem:[%s2 + $0x8] sm:$0xff]
        %v286 = vld [vmem:[%s2 + $0x10] sm:$0xff]
        %v287 = vld [vmem:[%s2 + $0x18] sm:$0xff]
        %v288 = vadd.f32 %v275, %v276
        %289 = vadd.xlane.f32.xlu0 %v288
        %v290 = vpop.xlane.xlu0 %289
        %v291 = vadd.f32 %v277, %v278
        %292 = vadd.xlane.f32.xlu0 %v291
        %v293 = vpop.xlane.xlu0 %292
        %v294 = vadd.f32 %v279, %v280
        %295 = vadd.xlane.f32.xlu0 %v294
        %v296 = vpop.xlane.xlu0 %295
        %v297 = vadd.f32 %v281, %v282
        %298 = vadd.xlane.f32.xlu0 %v297
        %v299 = vpop.xlane.xlu0 %298
        %v300 = vmul.f32 %v290, 0.00390625
        %v301 = vmul.f32 %v293, 0.00390625
        %v302 = vmul.f32 %v296, 0.00390625
        %v303 = vmul.f32 %v299, 0.00390625
        %v304 = vmax.f32 %v275, %v276
        %305 = vmax.xlane.f32.xlu0 %v304
        %v306 = vpop.xlane.xlu0 %305
        %v307 = vmax.f32 %v277, %v278
        %308 = vmax.xlane.f32.xlu0 %v307
        %v309 = vpop.xlane.xlu0 %308
        %v310 = vmax.f32 %v279, %v280
        %311 = vmax.xlane.f32.xlu0 %v310
        %v312 = vpop.xlane.xlu0 %311
        %v313 = vmax.f32 %v281, %v282
        %314 = vmax.xlane.f32.xlu0 %v313
        %v315 = vpop.xlane.xlu0 %314
        %vm316 = vcmask 261120
        %v318 = vsel %vm316, %v283, 0
        %320 = vmatprep.subr.mxu0 0.0
        %321 = vmatpush1.msra.mxu0 %v300
        %322 = vmatprep.subr.mxu0 0.0
        %323 = vmatpush1.msra.mxu0 %v301
        %324 = vmatprep.subr.mxu0 0.0
        %325 = vmatpush1.msra.mxu0 %v302
        %326 = vmatprep.subr.mxu0 0.0
        %327 = vmatpush1.msra.mxu0 %v303
        %328 = vmatprep.subr.mxu0 0.0
        %329 = vmatpush1.msra.mxu0 0.0
        %330 = vmatprep.subr.mxu0 0.0
        %331 = vmatpush1.msra.mxu0 0.0
        %332 = vmatprep.subr.mxu0 0.0
        %333 = vmatpush1.msra.mxu0 0.0
        %334 = vmatprep.subr.mxu0 0.0
        %335 = vmatpush1.msra.mxu0 0.0
        %336 = vmatprep.subr.mxu0 0.0
        %337 = vmatpush1.msra.mxu0 0.0
        %338 = vmatprep.subr.mxu0 0.0
        %339 = vmatpush1.msra.mxu0 0.0
        %340 = vmatprep.subr.mxu0 0.0
        %341 = vmatpush1.msra.mxu0 0.0
        %342 = vmatprep.subr.mxu0 0.0
        %343 = vmatpush1.msra.mxu0 0.0
        %344 = vmatprep.subr.mxu0 0.0
        %345 = vmatpush1.msra.mxu0 0.0
        %346 = vmatprep.subr.mxu0 0.0
        %347 = vmatpush1.msra.mxu0 0.0
        %348 = vmatprep.subr.mxu0 0.0
        %349 = vmatpush1.msra.mxu0 0.0
        %350 = vmatprep.subr.mxu0 0.0
        %351 = vmatpush1.msra.mxu0 0.0
        %352 = vmatprep.subr.mxu0 0.0
        %353 = vmatpush1.msra.mxu0 0.0
        %354 = vmatprep.subr.mxu0 0.0
        %355 = vmatpush1.msra.mxu0 0.0
        %356 = vmatprep.subr.mxu0 0.0
        %357 = vmatpush1.msra.mxu0 0.0
        %358 = vmatprep.subr.mxu0 0.0
        %359 = vmatpush1.msra.mxu0 0.0
        %360 = vmatprep.subr.mxu0 0.0
        %361 = vmatpush1.msra.mxu0 0.0
        %362 = vmatprep.subr.mxu0 0.0
        %363 = vmatpush1.msra.mxu0 0.0
        %364 = vmatprep.subr.mxu0 0.0
        %365 = vmatpush1.msra.mxu0 0.0
        %366 = vmatprep.subr.mxu0 0.0
        %367 = vmatpush1.msra.mxu0 0.0
        %368 = vmatprep.subr.mxu0 0.0
        %369 = vmatpush1.msra.mxu0 0.0
        %370 = vmatprep.subr.mxu0 0.0
        %371 = vmatpush1.msra.mxu0 0.0
        %372 = vmatprep.subr.mxu0 0.0
        %373 = vmatpush1.msra.mxu0 0.0
        %374 = vmatprep.subr.mxu0 0.0
        %375 = vmatpush1.msra.mxu0 0.0
        %376 = vmatprep.subr.mxu0 0.0
        %377 = vmatpush1.msra.mxu0 0.0
        %378 = vmatprep.subr.mxu0 0.0
        %379 = vmatpush1.msra.mxu0 0.0
        %380 = vmatprep.subr.mxu0 0.0
        %381 = vmatpush1.msra.mxu0 0.0
        %382 = vmatprep.subr.mxu0 0.0
        %383 = vmatpush1.msra.mxu0 0.0
        %384 = vmatprep.mubr.f32.mxu0 0.0
        %385 = vmatmul.mubr.f32.gmra.mrb[0].mxu0 %v318
        %v386 = vpop.f32.mrb[0].mxu0
        %v387 = vadd.f32 0.0, %v386
        %v388 = vpop.f32.mrb[0].mxu0
        %389 = vdwg.mxu0
        %v390 = vmax.f32 %v387, 0.0
        %391 = vmatprep.subr.mxu0 0.0
        %392 = vmatpush1.msra.mxu0 %v306
        %393 = vmatprep.subr.mxu0 0.0
        %394 = vmatpush1.msra.mxu0 %v309
        %395 = vmatprep.subr.mxu0 0.0
        %396 = vmatpush1.msra.mxu0 %v312
        %397 = vmatprep.subr.mxu0 0.0
        %398 = vmatpush1.msra.mxu0 %v315
        %399 = vmatprep.subr.mxu0 0.0
        %400 = vmatpush1.msra.mxu0 0.0
        %401 = vmatprep.subr.mxu0 0.0
        %402 = vmatpush1.msra.mxu0 0.0
        %403 = vmatprep.subr.mxu0 0.0
        %404 = vmatpush1.msra.mxu0 0.0
        %405 = vmatprep.subr.mxu0 0.0
        %406 = vmatpush1.msra.mxu0 0.0
        %407 = vmatprep.subr.mxu0 0.0
        %408 = vmatpush1.msra.mxu0 0.0
        %409 = vmatprep.subr.mxu0 0.0
        %410 = vmatpush1.msra.mxu0 0.0
        %411 = vmatprep.subr.mxu0 0.0
        %412 = vmatpush1.msra.mxu0 0.0
        %413 = vmatprep.subr.mxu0 0.0
        %414 = vmatpush1.msra.mxu0 0.0
        %415 = vmatprep.subr.mxu0 0.0
        %416 = vmatpush1.msra.mxu0 0.0
        %417 = vmatprep.subr.mxu0 0.0
        %418 = vmatpush1.msra.mxu0 0.0
        %419 = vmatprep.subr.mxu0 0.0
        %420 = vmatpush1.msra.mxu0 0.0
        %421 = vmatprep.subr.mxu0 0.0
        %422 = vmatpush1.msra.mxu0 0.0
        %423 = vmatprep.subr.mxu0 0.0
        %424 = vmatpush1.msra.mxu0 0.0
        %425 = vmatprep.subr.mxu0 0.0
        %426 = vmatpush1.msra.mxu0 0.0
        %427 = vmatprep.subr.mxu0 0.0
        %428 = vmatpush1.msra.mxu0 0.0
        %429 = vmatprep.subr.mxu0 0.0
        %430 = vmatpush1.msra.mxu0 0.0
        %431 = vmatprep.subr.mxu0 0.0
        %432 = vmatpush1.msra.mxu0 0.0
        %433 = vmatprep.subr.mxu0 0.0
        %434 = vmatpush1.msra.mxu0 0.0
        %435 = vmatprep.subr.mxu0 0.0
        %436 = vmatpush1.msra.mxu0 0.0
        %437 = vmatprep.subr.mxu0 0.0
        %438 = vmatpush1.msra.mxu0 0.0
        %439 = vmatprep.subr.mxu0 0.0
        %440 = vmatpush1.msra.mxu0 0.0
        %441 = vmatprep.subr.mxu0 0.0
        %442 = vmatpush1.msra.mxu0 0.0
        %443 = vmatprep.subr.mxu0 0.0
        %444 = vmatpush1.msra.mxu0 0.0
        %445 = vmatprep.subr.mxu0 0.0
        %446 = vmatpush1.msra.mxu0 0.0
        %447 = vmatprep.subr.mxu0 0.0
        %448 = vmatpush1.msra.mxu0 0.0
        %449 = vmatprep.subr.mxu0 0.0
        %450 = vmatpush1.msra.mxu0 0.0
        %451 = vmatprep.subr.mxu0 0.0
        %452 = vmatpush1.msra.mxu0 0.0
        %453 = vmatprep.subr.mxu0 0.0
        %454 = vmatpush1.msra.mxu0 0.0
        %455 = vmatprep.mubr.f32.mxu0 0.0
        %456 = vmatmul.mubr.f32.gmra.mrb[0].mxu0 %v318
        %v457 = vpop.f32.mrb[0].mxu0
        %v458 = vadd.f32 0.0, %v457
        %v459 = vpop.f32.mrb[0].mxu0
        %460 = vdwg.mxu0
        %v461 = vmax.f32 %v458, 0.0
        %v462 = vadd.f32 %v390, %v461
        %vm463 = vcmask 31744
        %v465 = vsel %vm463, %v284, 0
        %v468 = vsel %vm463, %v285, 0
        %v471 = vsel %vm463, %v286, 0
        %v474 = vsel %vm463, %v287, 0
        %vm476 = vcmask 1043456
        %v478 = vsel %vm476, %v462, 0
        %480 = vmatprep.subr.mxu0 0.0
        %481 = vmatpush1.msra.mxu0 %v478
        %482 = vmatprep.subr.mxu0 0.0
        %483 = vmatpush1.msra.mxu0 0.0
        %484 = vmatprep.subr.mxu0 0.0
        %485 = vmatpush1.msra.mxu0 0.0
        %486 = vmatprep.subr.mxu0 0.0
        %487 = vmatpush1.msra.mxu0 0.0
        %488 = vmatprep.subr.mxu0 0.0
        %489 = vmatpush1.msra.mxu0 0.0
        %490 = vmatprep.subr.mxu0 0.0
        %491 = vmatpush1.msra.mxu0 0.0
        %492 = vmatprep.subr.mxu0 0.0
        %493 = vmatpush1.msra.mxu0 0.0
        %494 = vmatprep.subr.mxu0 0.0
        %495 = vmatpush1.msra.mxu0 0.0
        %496 = vmatprep.subr.mxu0 0.0
        %497 = vmatpush1.msra.mxu0 0.0
        %498 = vmatprep.subr.mxu0 0.0
        %499 = vmatpush1.msra.mxu0 0.0
        %500 = vmatprep.subr.mxu0 0.0
        %501 = vmatpush1.msra.mxu0 0.0
        %502 = vmatprep.subr.mxu0 0.0
        %503 = vmatpush1.msra.mxu0 0.0
        %504 = vmatprep.subr.mxu0 0.0
        %505 = vmatpush1.msra.mxu0 0.0
        %506 = vmatprep.subr.mxu0 0.0
        %507 = vmatpush1.msra.mxu0 0.0
        %508 = vmatprep.subr.mxu0 0.0
        %509 = vmatpush1.msra.mxu0 0.0
        %510 = vmatprep.subr.mxu0 0.0
        %511 = vmatpush1.msra.mxu0 0.0
        %512 = vmatprep.subr.mxu0 0.0
        %513 = vmatpush1.msra.mxu0 0.0
        %514 = vmatprep.subr.mxu0 0.0
        %515 = vmatpush1.msra.mxu0 0.0
        %516 = vmatprep.subr.mxu0 0.0
        %517 = vmatpush1.msra.mxu0 0.0
        %518 = vmatprep.subr.mxu0 0.0
        %519 = vmatpush1.msra.mxu0 0.0
        %520 = vmatprep.subr.mxu0 0.0
        %521 = vmatpush1.msra.mxu0 0.0
        %522 = vmatprep.subr.mxu0 0.0
        %523 = vmatpush1.msra.mxu0 0.0
        %524 = vmatprep.subr.mxu0 0.0
        %525 = vmatpush1.msra.mxu0 0.0
        %526 = vmatprep.subr.mxu0 0.0
        %527 = vmatpush1.msra.mxu0 0.0
        %528 = vmatprep.subr.mxu0 0.0
        %529 = vmatpush1.msra.mxu0 0.0
        %530 = vmatprep.subr.mxu0 0.0
        %531 = vmatpush1.msra.mxu0 0.0
        %532 = vmatprep.subr.mxu0 0.0
        %533 = vmatpush1.msra.mxu0 0.0
        %534 = vmatprep.subr.mxu0 0.0
        %535 = vmatpush1.msra.mxu0 0.0
        %536 = vmatprep.subr.mxu0 0.0
        %537 = vmatpush1.msra.mxu0 0.0
        %538 = vmatprep.subr.mxu0 0.0
        %539 = vmatpush1.msra.mxu0 0.0
        %540 = vmatprep.subr.mxu0 0.0
        %541 = vmatpush1.msra.mxu0 0.0
        %542 = vmatprep.subr.mxu0 0.0
        %543 = vmatpush1.msra.mxu0 0.0
        %544 = vmatprep.mubr.f32.mxu0 0.0
        %545 = vmatmul.mubr.f32.gmra.mrb[0].mxu0 %v465
        %v546 = vpop.f32.mrb[0].mxu0
        %v547 = vadd.f32 0.0, %v546
        %v548 = vpop.f32.mrb[0].mxu0
        %549 = vmatprep.mubr.f32.mxu0 0.0
        %550 = vmatmul.mubr.f32.gmra.mrb[0].mxu0 %v468
        %v551 = vpop.f32.mrb[0].mxu0
        %v552 = vadd.f32 0.0, %v551
        %v553 = vpop.f32.mrb[0].mxu0
        %554 = vmatprep.mubr.f32.mxu0 0.0
        %555 = vmatmul.mubr.f32.gmra.mrb[0].mxu0 %v471
        %v556 = vpop.f32.mrb[0].mxu0
        %v557 = vadd.f32 0.0, %v556
        %v558 = vpop.f32.mrb[0].mxu0
        %559 = vmatprep.mubr.f32.mxu0 0.0
        %560 = vmatmul.mubr.f32.gmra.mrb[0].mxu0 %v474
        %v561 = vpop.f32.mrb[0].mxu0
        %v562 = vadd.f32 0.0, %v561
        %v563 = vpop.f32.mrb[0].mxu0
        %564 = vdwg.mxu0
        %v565 = vxor.u32 %v547, 2147483648
        %v566 = vxor.u32 %v552, 2147483648
        %v567 = vxor.u32 %v557, 2147483648
        %v568 = vxor.u32 %v562, 2147483648
        %v569 = vmul.f32 %v565, 1.442695
        %v570 = vpow.pop %v569
        %v571 = vmul.f32 %v566, 1.442695
        %v572 = vpow.pop %v571
        %v573 = vmul.f32 %v567, 1.442695
        %v574 = vpow.pop %v573
        %v575 = vmul.f32 %v568, 1.442695
        %v576 = vpow.pop %v575
        %v577 = vadd.f32 %v570, 1.0
        %v578 = vadd.f32 %v572, 1.0
        %v579 = vadd.f32 %v574, 1.0
        %v580 = vadd.f32 %v576, 1.0
        %v581 = vrcp.pop %v577
        %v582 = vmul.f32 1.0, %v581
        %v583 = vrcp.pop %v578
        %v584 = vmul.f32 1.0, %v583
        %v585 = vrcp.pop %v579
        %v586 = vmul.f32 1.0, %v585
        %v587 = vrcp.pop %v580
        %v588 = vmul.f32 1.0, %v587
        %590 = vset.pattern.permute.xlu0 0
        %591 = vperm.xlu0 %590, %v582
        %v592 = vpop.permute.xlu0 %591
        %595 = vset.pattern.permute.xlu0 0
        %596 = vperm.xlu0 %595, %v584
        %v597 = vpop.permute.xlu0 %596
        %600 = vset.pattern.permute.xlu0 0
        %601 = vperm.xlu0 %600, %v586
        %v602 = vpop.permute.xlu0 %601
        %605 = vset.pattern.permute.xlu0 0
        %606 = vperm.xlu0 %605, %v588
        %v607 = vpop.permute.xlu0 %606
        %v609 = vmul.f32 %v275, %v592
        %v610 = vmul.f32 %v276, %v592
        %v611 = vmul.f32 %v277, %v597
        %v612 = vmul.f32 %v278, %v597
        %v613 = vmul.f32 %v279, %v602
        %v614 = vmul.f32 %v280, %v602
        %v615 = vmul.f32 %v281, %v607
        %v616 = vmul.f32 %v282, %v607
        %v617 = vadd.f32 %v609, %v611
        %v618 = vadd.f32 %v617, %v613
        %v619 = vadd.f32 %v618, %v615
        %v620 = vrot.slane %v619, 4
        %v621 = vadd.f32 %v619, %v620
        %v622 = vrot.slane %v621, 2
        %v623 = vadd.f32 %v621, %v622
        %v624 = vrot.slane %v623, 1
        %v625 = vadd.f32 %v623, %v624
        %v626 = vadd.f32 %v610, %v612
        %v627 = vadd.f32 %v626, %v614
        %v628 = vadd.f32 %v627, %v616
        %v629 = vrot.slane %v628, 4
        %v630 = vadd.f32 %v628, %v629
        %v631 = vrot.slane %v630, 2
        %v632 = vadd.f32 %v630, %v631
        %v633 = vrot.slane %v632, 1
        %v634 = vadd.f32 %v632, %v633
        %v635 = vmul.f32 %v625, 0.03125
        %v636 = vmul.f32 %v634, 0.03125
        %v637 = vmax.f32 %v609, %v613
        %v638 = vmax.f32 %v611, %v615
        %v639 = vmax.f32 %v637, %v638
        %v640 = vrot.slane %v639, 4
        %v641 = vmax.f32 %v639, %v640
        %v642 = vrot.slane %v641, 2
        %v643 = vmax.f32 %v641, %v642
        %v644 = vrot.slane %v643, 1
        %v645 = vmax.f32 %v643, %v644
        %v646 = vmax.f32 %v610, %v614
        %v647 = vmax.f32 %v612, %v616
        %v648 = vmax.f32 %v646, %v647
        %v649 = vrot.slane %v648, 4
        %v650 = vmax.f32 %v648, %v649
        %v651 = vrot.slane %v650, 2
        %v652 = vmax.f32 %v650, %v651
        %v653 = vrot.slane %v652, 1
        %v654 = vmax.f32 %v652, %v653
        %v655 = vld [vmem:[#allocation5] sm:$0xff]
        %v656 = vld [vmem:[#allocation5 + $0x8] sm:$0xff]
        %v657 = vld [vmem:[#allocation5 + $0x10] sm:$0xff]
        %v658 = vld [vmem:[#allocation5 + $0x18] sm:$0xff]
        %v659 = vld [vmem:[#allocation5 + $0x20] sm:$0xff]
        %v660 = vld [vmem:[#allocation5 + $0x28] sm:$0xff]
        %v661 = vld [vmem:[#allocation5 + $0x30] sm:$0xff]
        %v662 = vld [vmem:[#allocation5 + $0x38] sm:$0xff]
        %v663 = vld [vmem:[#allocation5 + $0x40] sm:$0xff]
        %v664 = vld [vmem:[#allocation5 + $0x48] sm:$0xff]
        %v665 = vld [vmem:[#allocation5 + $0x50] sm:$0xff]
        %v666 = vld [vmem:[#allocation5 + $0x58] sm:$0xff]
        %v667 = vld [vmem:[#allocation5 + $0x60] sm:$0xff]
        %v668 = vld [vmem:[#allocation5 + $0x68] sm:$0xff]
        %v669 = vld [vmem:[#allocation5 + $0x70] sm:$0xff]
        %v670 = vld [vmem:[#allocation5 + $0x78] sm:$0xff]
        %v671 = vld [vmem:[#allocation5 + $0x80] sm:$0xff]
        %v672 = vld [vmem:[#allocation5 + $0x88] sm:$0xff]
        %v673 = vld [vmem:[#allocation5 + $0x90] sm:$0xff]
        %v674 = vld [vmem:[#allocation5 + $0x98] sm:$0xff]
        %v675 = vld [vmem:[#allocation5 + $0xa0] sm:$0xff]
        %v676 = vld [vmem:[#allocation5 + $0xa8] sm:$0xff]
        %v677 = vld [vmem:[#allocation5 + $0xb0] sm:$0xff]
        %v678 = vld [vmem:[#allocation5 + $0xb8] sm:$0xff]
        %v679 = vld [vmem:[#allocation5 + $0xc0] sm:$0xff]
        %v680 = vld [vmem:[#allocation5 + $0xc8] sm:$0xff]
        %v681 = vld [vmem:[#allocation5 + $0xd0] sm:$0xff]
        %v682 = vld [vmem:[#allocation5 + $0xd8] sm:$0xff]
        %v683 = vld [vmem:[#allocation5 + $0xe0] sm:$0xff]
        %v684 = vld [vmem:[#allocation5 + $0xe8] sm:$0xff]
        %v685 = vld [vmem:[#allocation5 + $0xf0] sm:$0xff]
        %v686 = vld [vmem:[#allocation5 + $0xf8] sm:$0xff]
        %v687 = vld [vmem:[#allocation5 + $0x100] sm:$0xff]
        %v688 = vld [vmem:[#allocation5 + $0x108] sm:$0xff]
        %v689 = vld [vmem:[#allocation5 + $0x110] sm:$0xff]
        %v690 = vld [vmem:[#allocation5 + $0x118] sm:$0xff]
        %v691 = vld [vmem:[#allocation5 + $0x120] sm:$0xff]
        %v692 = vld [vmem:[#allocation5 + $0x128] sm:$0xff]
        %v693 = vld [vmem:[#allocation5 + $0x130] sm:$0xff]
        %v694 = vld [vmem:[#allocation5 + $0x138] sm:$0xff]
        %v695 = vld [vmem:[#allocation5 + $0x140] sm:$0xff]
        %v696 = vld [vmem:[#allocation5 + $0x148] sm:$0xff]
        %v697 = vld [vmem:[#allocation5 + $0x150] sm:$0xff]
        %v698 = vld [vmem:[#allocation5 + $0x158] sm:$0xff]
        %v699 = vld [vmem:[#allocation5 + $0x160] sm:$0xff]
        %v700 = vld [vmem:[#allocation5 + $0x168] sm:$0xff]
        %v701 = vld [vmem:[#allocation5 + $0x170] sm:$0xff]
        %v702 = vld [vmem:[#allocation5 + $0x178] sm:$0xff]
        %v703 = vld [vmem:[#allocation5 + $0x180] sm:$0xff]
        %v704 = vld [vmem:[#allocation5 + $0x188] sm:$0xff]
        %v705 = vld [vmem:[#allocation5 + $0x190] sm:$0xff]
        %v706 = vld [vmem:[#allocation5 + $0x198] sm:$0xff]
        %v707 = vld [vmem:[#allocation5 + $0x1a0] sm:$0xff]
        %v708 = vld [vmem:[#allocation5 + $0x1a8] sm:$0xff]
        %v709 = vld [vmem:[#allocation5 + $0x1b0] sm:$0xff]
        %v710 = vld [vmem:[#allocation5 + $0x1b8] sm:$0xff]
        %v711 = vld [vmem:[#allocation5 + $0x1c0] sm:$0xff]
        %v712 = vld [vmem:[#allocation5 + $0x1c8] sm:$0xff]
        %v713 = vld [vmem:[#allocation5 + $0x1d0] sm:$0xff]
        %v714 = vld [vmem:[#allocation5 + $0x1d8] sm:$0xff]
        %v715 = vld [vmem:[#allocation5 + $0x1e0] sm:$0xff]
        %v716 = vld [vmem:[#allocation5 + $0x1e8] sm:$0xff]
        %v717 = vld [vmem:[#allocation5 + $0x1f0] sm:$0xff]
        %v718 = vld [vmem:[#allocation5 + $0x1f8] sm:$0xff]
        %v719 = vld [vmem:[#allocation7] sm:$0xff]
        %v720 = vld [vmem:[#allocation7 + $0x8] sm:$0xff]
        %v721 = vld [vmem:[#allocation7 + $0x10] sm:$0xff]
        %v722 = vld [vmem:[#allocation7 + $0x18] sm:$0xff]
        %v723 = vld [vmem:[#allocation7 + $0x20] sm:$0xff]
        %v724 = vld [vmem:[#allocation7 + $0x28] sm:$0xff]
        %v725 = vld [vmem:[#allocation7 + $0x30] sm:$0xff]
        %v726 = vld [vmem:[#allocation7 + $0x38] sm:$0xff]
        %v727 = vld [vmem:[#allocation7 + $0x40] sm:$0xff]
        %v728 = vld [vmem:[#allocation7 + $0x48] sm:$0xff]
        %v729 = vld [vmem:[#allocation7 + $0x50] sm:$0xff]
        %v730 = vld [vmem:[#allocation7 + $0x58] sm:$0xff]
        %v731 = vld [vmem:[#allocation7 + $0x60] sm:$0xff]
        %v732 = vld [vmem:[#allocation7 + $0x68] sm:$0xff]
        %v733 = vld [vmem:[#allocation7 + $0x70] sm:$0xff]
        %v734 = vld [vmem:[#allocation7 + $0x78] sm:$0xff]
        %v735 = vld [vmem:[#allocation7 + $0x80] sm:$0xff]
        %v736 = vld [vmem:[#allocation7 + $0x88] sm:$0xff]
        %v737 = vld [vmem:[#allocation7 + $0x90] sm:$0xff]
        %v738 = vld [vmem:[#allocation7 + $0x98] sm:$0xff]
        %v739 = vld [vmem:[#allocation7 + $0xa0] sm:$0xff]
        %v740 = vld [vmem:[#allocation7 + $0xa8] sm:$0xff]
        %v741 = vld [vmem:[#allocation7 + $0xb0] sm:$0xff]
        %v742 = vld [vmem:[#allocation7 + $0xb8] sm:$0xff]
        %v743 = vld [vmem:[#allocation7 + $0xc0] sm:$0xff]
        %v744 = vld [vmem:[#allocation7 + $0xc8] sm:$0xff]
        %v745 = vld [vmem:[#allocation7 + $0xd0] sm:$0xff]
        %v746 = vld [vmem:[#allocation7 + $0xd8] sm:$0xff]
        %v747 = vld [vmem:[#allocation7 + $0xe0] sm:$0xff]
        %v748 = vld [vmem:[#allocation7 + $0xe8] sm:$0xff]
        %v749 = vld [vmem:[#allocation7 + $0xf0] sm:$0xff]
        %v750 = vld [vmem:[#allocation7 + $0xf8] sm:$0xff]
        %v751 = vld [vmem:[#allocation7 + $0x100] sm:$0xff]
        %v752 = vld [vmem:[#allocation7 + $0x108] sm:$0xff]
        %v753 = vld [vmem:[#allocation7 + $0x110] sm:$0xff]
        %v754 = vld [vmem:[#allocation7 + $0x118] sm:$0xff]
        %v755 = vld [vmem:[#allocation7 + $0x120] sm:$0xff]
        %v756 = vld [vmem:[#allocation7 + $0x128] sm:$0xff]
        %v757 = vld [vmem:[#allocation7 + $0x130] sm:$0xff]
        %v758 = vld [vmem:[#allocation7 + $0x138] sm:$0xff]
        %v759 = vld [vmem:[#allocation7 + $0x140] sm:$0xff]
        %v760 = vld [vmem:[#allocation7 + $0x148] sm:$0xff]
        %v761 = vld [vmem:[#allocation7 + $0x150] sm:$0xff]
        %v762 = vld [vmem:[#allocation7 + $0x158] sm:$0xff]
        %v763 = vld [vmem:[#allocation7 + $0x160] sm:$0xff]
        %v764 = vld [vmem:[#allocation7 + $0x168] sm:$0xff]
        %v765 = vld [vmem:[#allocation7 + $0x170] sm:$0xff]
        %v766 = vld [vmem:[#allocation7 + $0x178] sm:$0xff]
        %v767 = vld [vmem:[#allocation7 + $0x180] sm:$0xff]
        %v768 = vld [vmem:[#allocation7 + $0x188] sm:$0xff]
        %v769 = vld [vmem:[#allocation7 + $0x190] sm:$0xff]
        %v770 = vld [vmem:[#allocation7 + $0x198] sm:$0xff]
        %v771 = vld [vmem:[#allocation7 + $0x1a0] sm:$0xff]
        %v772 = vld [vmem:[#allocation7 + $0x1a8] sm:$0xff]
        %v773 = vld [vmem:[#allocation7 + $0x1b0] sm:$0xff]
        %v774 = vld [vmem:[#allocation7 + $0x1b8] sm:$0xff]
        %v775 = vld [vmem:[#allocation7 + $0x1c0] sm:$0xff]
        %v776 = vld [vmem:[#allocation7 + $0x1c8] sm:$0xff]
        %v777 = vld [vmem:[#allocation7 + $0x1d0] sm:$0xff]
        %v778 = vld [vmem:[#allocation7 + $0x1d8] sm:$0xff]
        %v779 = vld [vmem:[#allocation7 + $0x1e0] sm:$0xff]
        %v780 = vld [vmem:[#allocation7 + $0x1e8] sm:$0xff]
        %v781 = vld [vmem:[#allocation7 + $0x1f0] sm:$0xff]
        %v782 = vld [vmem:[#allocation7 + $0x1f8] sm:$0xff]
        %783 = vmatprep.subr.mxu0 %v720
        %784 = vmatpush1.msra.mxu0 %v719
        %785 = vmatprep.subr.mxu0 %v722
        %786 = vmatpush1.msra.mxu0 %v721
        %787 = vmatprep.subr.mxu0 %v724
        %788 = vmatpush1.msra.mxu0 %v723
        %789 = vmatprep.subr.mxu0 %v726
        %790 = vmatpush1.msra.mxu0 %v725
        %791 = vmatprep.subr.mxu0 %v728
        %792 = vmatpush1.msra.mxu0 %v727
        %793 = vmatprep.subr.mxu0 %v730
        %794 = vmatpush1.msra.mxu0 %v729
        %795 = vmatprep.subr.mxu0 %v732
        %796 = vmatpush1.msra.mxu0 %v731
        %797 = vmatprep.subr.mxu0 %v734
        %798 = vmatpush1.msra.mxu0 %v733
        %799 = vmatprep.subr.mxu0 %v736
        %800 = vmatpush1.msra.mxu0 %v735
        %801 = vmatprep.subr.mxu0 %v738
        %802 = vmatpush1.msra.mxu0 %v737
        %803 = vmatprep.subr.mxu0 %v740
        %804 = vmatpush1.msra.mxu0 %v739
        %805 = vmatprep.subr.mxu0 %v742
        %806 = vmatpush1.msra.mxu0 %v741
        %807 = vmatprep.subr.mxu0 %v744
        %808 = vmatpush1.msra.mxu0 %v743
        %809 = vmatprep.subr.mxu0 %v746
        %810 = vmatpush1.msra.mxu0 %v745
        %811 = vmatprep.subr.mxu0 %v748
        %812 = vmatpush1.msra.mxu0 %v747
        %813 = vmatprep.subr.mxu0 %v750
        %814 = vmatpush1.msra.mxu0 %v749
        %815 = vmatprep.subr.mxu0 %v752
        %816 = vmatpush1.msra.mxu0 %v751
        %817 = vmatprep.subr.mxu0 %v754
        %818 = vmatpush1.msra.mxu0 %v753
        %819 = vmatprep.subr.mxu0 %v756
        %820 = vmatpush1.msra.mxu0 %v755
        %821 = vmatprep.subr.mxu0 %v758
        %822 = vmatpush1.msra.mxu0 %v757
        %823 = vmatprep.subr.mxu0 %v760
        %824 = vmatpush1.msra.mxu0 %v759
        %825 = vmatprep.subr.mxu0 %v762
        %826 = vmatpush1.msra.mxu0 %v761
        %827 = vmatprep.subr.mxu0 %v764
        %828 = vmatpush1.msra.mxu0 %v763
        %829 = vmatprep.subr.mxu0 %v766
        %830 = vmatpush1.msra.mxu0 %v765
        %831 = vmatprep.subr.mxu0 %v768
        %832 = vmatpush1.msra.mxu0 %v767
        %833 = vmatprep.subr.mxu0 %v770
        %834 = vmatpush1.msra.mxu0 %v769
        %835 = vmatprep.subr.mxu0 %v772
        %836 = vmatpush1.msra.mxu0 %v771
        %837 = vmatprep.subr.mxu0 %v774
        %838 = vmatpush1.msra.mxu0 %v773
        %839 = vmatprep.subr.mxu0 %v776
        %840 = vmatpush1.msra.mxu0 %v775
        %841 = vmatprep.subr.mxu0 %v778
        %842 = vmatpush1.msra.mxu0 %v777
        %843 = vmatprep.subr.mxu0 %v780
        %844 = vmatpush1.msra.mxu0 %v779
        %845 = vmatprep.subr.mxu0 %v782
        %846 = vmatpush1.msra.mxu0 %v781
        %847 = vmatprep.mubr.f32.mxu0 %v654
        %848 = vmatmul.mubr.f32.gmra.mrb[0].mxu0 %v645
        %v849 = vpop.f32.mrb[0].mxu0
        %v850 = vadd.f32 0.0, %v849
        %v851 = vpop.f32.mrb[0].mxu0
        %v852 = vadd.f32 0.0, %v851
        %853 = vdwg.mxu0
        %854 = vmatprep.subr.mxu0 %v656
        %855 = vmatpush1.msra.mxu0 %v655
        %856 = vmatprep.subr.mxu0 %v658
        %857 = vmatpush1.msra.mxu0 %v657
        %858 = vmatprep.subr.mxu0 %v660
        %859 = vmatpush1.msra.mxu0 %v659
        %860 = vmatprep.subr.mxu0 %v662
        %861 = vmatpush1.msra.mxu0 %v661
        %862 = vmatprep.subr.mxu0 %v664
        %863 = vmatpush1.msra.mxu0 %v663
        %864 = vmatprep.subr.mxu0 %v666
        %865 = vmatpush1.msra.mxu0 %v665
        %866 = vmatprep.subr.mxu0 %v668
        %867 = vmatpush1.msra.mxu0 %v667
        %868 = vmatprep.subr.mxu0 %v670
        %869 = vmatpush1.msra.mxu0 %v669
        %870 = vmatprep.subr.mxu0 %v672
        %871 = vmatpush1.msra.mxu0 %v671
        %872 = vmatprep.subr.mxu0 %v674
        %873 = vmatpush1.msra.mxu0 %v673
        %874 = vmatprep.subr.mxu0 %v676
        %875 = vmatpush1.msra.mxu0 %v675
        %876 = vmatprep.subr.mxu0 %v678
        %877 = vmatpush1.msra.mxu0 %v677
        %878 = vmatprep.subr.mxu0 %v680
        %879 = vmatpush1.msra.mxu0 %v679
        %880 = vmatprep.subr.mxu0 %v682
        %881 = vmatpush1.msra.mxu0 %v681
        %882 = vmatprep.subr.mxu0 %v684
        %883 = vmatpush1.msra.mxu0 %v683
        %884 = vmatprep.subr.mxu0 %v686
        %885 = vmatpush1.msra.mxu0 %v685
        %886 = vmatprep.subr.mxu0 %v688
        %887 = vmatpush1.msra.mxu0 %v687
        %888 = vmatprep.subr.mxu0 %v690
        %889 = vmatpush1.msra.mxu0 %v689
        %890 = vmatprep.subr.mxu0 %v692
        %891 = vmatpush1.msra.mxu0 %v691
        %892 = vmatprep.subr.mxu0 %v694
        %893 = vmatpush1.msra.mxu0 %v693
        %894 = vmatprep.subr.mxu0 %v696
        %895 = vmatpush1.msra.mxu0 %v695
        %896 = vmatprep.subr.mxu0 %v698
        %897 = vmatpush1.msra.mxu0 %v697
        %898 = vmatprep.subr.mxu0 %v700
        %899 = vmatpush1.msra.mxu0 %v699
        %900 = vmatprep.subr.mxu0 %v702
        %901 = vmatpush1.msra.mxu0 %v701
        %902 = vmatprep.subr.mxu0 %v704
        %903 = vmatpush1.msra.mxu0 %v703
        %904 = vmatprep.subr.mxu0 %v706
        %905 = vmatpush1.msra.mxu0 %v705
        %906 = vmatprep.subr.mxu0 %v708
        %907 = vmatpush1.msra.mxu0 %v707
        %908 = vmatprep.subr.mxu0 %v710
        %909 = vmatpush1.msra.mxu0 %v709
        %910 = vmatprep.subr.mxu0 %v712
        %911 = vmatpush1.msra.mxu0 %v711
        %912 = vmatprep.subr.mxu0 %v714
        %913 = vmatpush1.msra.mxu0 %v713
        %914 = vmatprep.subr.mxu0 %v716
        %915 = vmatpush1.msra.mxu0 %v715
        %916 = vmatprep.subr.mxu0 %v718
        %917 = vmatpush1.msra.mxu0 %v717
        %918 = vmatprep.mubr.f32.mxu0 %v636
        %919 = vmatmul.mubr.f32.gmra.mrb[0].mxu0 %v635
        %v920 = vpop.f32.mrb[0].mxu0
        %v921 = vadd.f32 %v850, %v920
        %v922 = vpop.f32.mrb[0].mxu0
        %v923 = vadd.f32 %v852, %v922
        %924 = vdwg.mxu0
        %v925 = vxor.u32 %v921, 2147483648
        %v926 = vxor.u32 %v923, 2147483648
        %v927 = vmul.f32 %v925, 1.442695
        %v928 = vpow.pop %v927
        %v929 = vmul.f32 %v926, 1.442695
        %v930 = vpow.pop %v929
        %v931 = vadd.f32 %v928, 1.0
        %v932 = vadd.f32 %v930, 1.0
        %v933 = vrcp.pop %v931
        %v934 = vmul.f32 1.0, %v933
        %v935 = vrcp.pop %v932
        %v936 = vmul.f32 1.0, %v935
        %v937 = vlaneseq
        %v938 = vshrl.u32 %v937, 7
        %v939 = vsub.s32 0, %v938
        %v940 = vrot.slane %v934, %v939
        %v941 = vlaneseq
        %v942 = vshrl.u32 %v941, 7
        %v943 = vsub.s32 0, %v942
        %v944 = vrot.slane %v936, %v943
        %v945 = vmul.f32 %v609, %v940
        %v946 = vmul.f32 %v610, %v944
        %v947 = vmul.f32 %v611, %v940
        %v948 = vmul.f32 %v612, %v944
        %v949 = vmul.f32 %v613, %v940
        %v950 = vmul.f32 %v614, %v944
        %v951 = vmul.f32 %v615, %v940
        %v952 = vmul.f32 %v616, %v944
        %953 = vst [vmem:[%s272] sm:$0xff] %v945
        %954 = vst [vmem:[%s272 + $0x8] sm:$0xff] %v946
        %955 = vst [vmem:[%s272 + $0x10] sm:$0xff] %v947
        %956 = vst [vmem:[%s272 + $0x18] sm:$0xff] %v948
        %957 = vst [vmem:[%s272 + $0x20] sm:$0xff] %v949
        %958 = vst [vmem:[%s272 + $0x28] sm:$0xff] %v950
        %959 = vst [vmem:[%s272 + $0x30] sm:$0xff] %v951
        %960 = vst [vmem:[%s272 + $0x38] sm:$0xff] %v952
        %s961 = sand.u32 %s141, 1
        %s962 = scalar_lea.sflag [#allocation4], %s961
        %s963 = sand.u32 %s141, 1
        %s964 = smul.addr %s963, 64
        %s965 = scalar_lea.vmem [#allocation8], %s964
        // Predicated region
        $region53: #{tpu_custom_call.1} parent=39 // pred_check
          %p966 = pneg %p151
        $region54: #{tpu_custom_call.1} parent=39 // pred_check_branch
          %968 = sbr.rel (%p966) target = $region56
        $region55: #{tpu_custom_call.1} parent=39 // pred_region
          %s969 = smul.u32 4, %s23
          %s971 = ssub.s32 1024, 1024
          %972 = vsyncadd %s962, %s971
          %s973 = smul.addr %s969, 2
          %s974 = smul.addr %s973, 128
          %s975 = scalar_lea.hbm %s5, %s974
          %s976 = sshll.u32 %s965, 4
          %s977 = int_to_ptr.vmem [resolvable:$true] %s976
          %982 = dma.vmem_to_hbm [thread:$0]  %s977, 1024, %s975, %s962, 256, 256, 16
        $region56: #{tpu_custom_call.1} parent=39 // pred_fallthru
          _
      $region40: #{tpu_custom_call.1} parent=5 // pred_fallthru
        _
      %p983 = scmp.le.s32.totalorder 2, %s18
      // Predicated region
      $region57: #{tpu_custom_call.1} parent=5 // pred_check
        %p984 = pneg %p983
      $region58: #{tpu_custom_call.1} parent=5 // pred_check_branch
        %986 = sbr.rel (%p984) target = $region60
      $region59: #{tpu_custom_call.1} parent=5 // pred_region
        %s987 = ssub.s32 %s18, 2
        // Predicated region
        $region61: #{tpu_custom_call.1} parent=59 // pred_check
          %p988 = pneg %p157
        $region62: #{tpu_custom_call.1} parent=59 // pred_check_branch
          %990 = sbr.rel (%p988) target = $region64
        $region63: #{tpu_custom_call.1} parent=59 // pred_region
          %s991 = sand.u32 %s142, 1
          %s992 = scalar_lea.sflag [#allocation4], %s991
          %s993 = sand.u32 %s142, 1
          %s994 = smul.addr %s993, 64
          %s995 = scalar_lea.vmem [#allocation8], %s994
          %996 = dma.done %s992, 1024
        $region64: #{tpu_custom_call.1} parent=59 // pred_fallthru
          _
      $region60: #{tpu_custom_call.1} parent=5 // pred_fallthru
        _
    $region6: #{tpu_custom_call.1} parent=1 // loop_footer
      %s22 = sadd.s32 1, %s18
    $region7: #{tpu_custom_call.1} parent=1 // loop_footer_branch
      %17 = sbr.rel target = $region3
    $region8: #{tpu_custom_call.1} parent=1 // loop_exit
      _
    %997 = vsyncpa [#allocation3], 1
    %s998 = scalar_lea.sflag [#allocation3], 1
    %999 = vsyncpa %s998, 1
    %1000 = vsyncpa [#allocation6], 1
    %1001 = vsyncpa [#allocation4], 1
    %s1002 = scalar_lea.sflag [#allocation4], 1
    %1003 = vsyncpa %s1002, 1

</llo_original>
